<compile_context>
chip_gen: v6e
topology: v6e:2x2x1
jax: 0.10.0
libtpu: 0.0.40
codegen_flags: <defaults>
</compile_context>

<pallas_src>
import functools

import jax
import jax.numpy as jnp
from jax.experimental import pallas as pl
from jax.experimental.pallas import tpu as pltpu

EPS = 1e-5


def _daam_kernel(head_dim, x_ref, rowpos_ref, off_ref, ninv2c_ref, o_ref):
    # x_ref / o_ref: (TB, L, F) data tiles.
    # rowpos_ref / off_ref / ninv2c_ref: (L, F) f32, resident across the whole grid.
    y = x_ref[...].astype(jnp.float32)                      # (TB, L, F)
    L = y.shape[1]
    p = rowpos_ref[...]                                     # (L, F): row index within its head

    # In-segment neighbour masks: tiny (L, F) compares, built once and shared by both
    # segment reductions (mean and variance).
    masks = [(p >= j, p <= (head_dim - 1 - j)) for j in range(1, head_dim)]

    def seg_mean(v):
        # Per-head (segment of `head_dim` consecutive rows along L) mean, broadcast back
        # to every row of the segment.  Exact f32 on the VPU/XLU: each in-segment
        # neighbour is gathered with a sublane roll; the masks guarantee that values
        # crossing a segment boundary (or the cyclic wrap of the roll) never contribute.
        acc = v
        for j in range(1, head_dim):
            dn = pltpu.roll(v, j, axis=1)          # [b, l] <- v[b, l - j]
            up = pltpu.roll(v, L - j, axis=1)      # [b, l] <- v[b, l + j]
            m_dn, m_up = masks[j - 1]
            if head_dim == 2:
                # masks are complementary -> single select
                acc = acc + jnp.where(m_dn, dn, up)
            else:
                acc = acc + jnp.where(m_dn, dn, 0.0) + jnp.where(m_up, up, 0.0)
        return acc * jnp.float32(1.0 / head_dim)

    mean = seg_mean(y)
    dm = y - mean
    # var = E_head[(y - mean)^2]  (== reference's |E[y^2] - mean^2|, but cancellation-free);
    # the module's +1e-8 and eps are folded into one constant.
    var_eps = seg_mean(dm * dm) + jnp.float32(1e-8 + EPS)
    inv_var = pl.reciprocal(var_eps, approx=True)           # EUP slot, ~2^-12 rel err
    d = dm - off_ref[...]                                    # y - (mean + mean_offset)
    # exp(-(d^2) / (var+eps) / (2c)); the -1/(2c) factor arrives precomputed per row.
    o_ref[...] = (y * jnp.exp((d * d) * (inv_var * ninv2c_ref[...]))).astype(o_ref.dtype)


def multihead_daam(x, c_all, off_all, num_heads, *, block_batch=None):
    """x: (B, num_layers, T, F); c_all / off_all: (num_heads, F). Returns (B, num_layers, F)."""
    B, L, T, F = x.shape
    assert L % num_heads == 0, "num_layers must be divisible by num_heads"
    head_dim = L // num_heads

    # Time pooling (AdaptiveAvgPool1d(1)).  The module always builds T == 1, so this is a
    # free metadata reshape.
    if T == 1:
        x2 = x.reshape(B, L, F)
    else:
        # TODO(synk): fuse the T > 1 time-mean into the kernel (costs an extra HBM pass today).
        x2 = x.mean(axis=2)

    f32 = jnp.float32
    # Per-row (L, F) tables, resident in VMEM across the whole grid (constant index_map).
    off_rows = jnp.repeat(off_all.astype(f32), head_dim, axis=0)                    # (L, F)
    neg_inv_2c_rows = -0.5 / jnp.repeat(c_all.astype(f32), head_dim, axis=0)        # (L, F)
    rowpos = jnp.tile(jnp.arange(head_dim, dtype=f32), num_heads)                   # l % head_dim
    rowpos_rows = jnp.broadcast_to(rowpos[:, None], (L, F))                         # (L, F)

    # Batch tile: big enough (multi-MiB) to amortize the ~0.35us/step overhead and reach the
    # HBM roofline, small enough that double-buffered in/out tiles plus kernel temporaries
    # stay well under v7x's 64 MiB VMEM.  (256 * 16 * 128 * 4 B = 2 MiB per tile.)
    if block_batch is None:
        block_batch = 256
    TB = max(1, min(B, block_batch))
    grid = (pl.cdiv(B, TB),)

    kernel = functools.partial(_daam_kernel, head_dim)

    out = pl.pallas_call(
        kernel,
        out_shape=jax.ShapeDtypeStruct((B, L, F), x.dtype),
        grid=grid,
        in_specs=[
            pl.BlockSpec((TB, L, F), lambda i: (i, 0, 0)),   # data tile (lane-dense F)
            pl.BlockSpec((L, F), lambda i: (0, 0)),          # row position within head
            pl.BlockSpec((L, F), lambda i: (0, 0)),          # mean_offset per row
            pl.BlockSpec((L, F), lambda i: (0, 0)),          # -1/(2c) per row
        ],
        out_specs=pl.BlockSpec((TB, L, F), lambda i: (i, 0, 0)),
        compiler_params=pltpu.CompilerParams(
            dimension_semantics=("parallel",),
            # Raise the scoped VMEM ceiling (16/32 MiB defaults on v5e/v6e) while staying
            # comfortably below v7x's 64 MiB physical VMEM.
            vmem_limit_bytes=48 * 1024 * 1024,
        ),
    )(x2, rowpos_rows, off_rows, neg_inv_2c_rows)
    return out


def multihead_daam_reference(x, c_all, off_all, num_heads):
    """Pure-JAX reference mirroring the PyTorch forward."""
    B, L, T, F = x.shape
    head_dim = L // num_heads
    y = x.mean(axis=2).reshape(B, num_heads, head_dim, F)
    mean = y.mean(axis=2, keepdims=True)
    mean_x2 = (y ** 2).mean(axis=2, keepdims=True)
    var = jnp.abs(mean_x2 - mean ** 2) + 1e-8
    adj = mean + off_all[None, :, None, :]
    y_norm = (y - adj) / jnp.sqrt(var + EPS)
    y_t = jnp.exp(-(y_norm ** 2) / (2.0 * c_all[None, :, None, :]))
    return (y * y_t).reshape(B, L, F)


if __name__ == "__main__":
    key = jax.random.PRNGKey(0)
    k1, k2, k3 = jax.random.split(key, 3)

    B, num_layers, F = 8, 16, 128
    num_heads = 8                      # head_dim = 2

    x = jax.random.normal(k1, (B, num_layers, 1, F), dtype=jnp.float32)
    # Learnable params: init is c=2, mean_offset=0; perturb so both paths are exercised.
    c_all = 2.0 + 0.5 * jax.random.uniform(k2, (num_heads, F), dtype=jnp.float32)
    off_all = 0.1 * jax.random.normal(k3, (num_heads, F), dtype=jnp.float32)

    # block_batch=4 keeps the demo tiny while still exercising a multi-step (even) grid.
    out = multihead_daam(x, c_all, off_all, num_heads, block_batch=4)
    out = jax.block_until_ready(out)

    ref = multihead_daam_reference(x, c_all, off_all, num_heads)
    assert out.shape == (B, num_layers, F)

    # Tolerance covers the eps-dominated 2-sample-variance sensitivity plus the approximate
    # EUP reciprocal of (var + eps); structural bugs would produce O(0.1-1) errors.
    max_err = float(jnp.max(jnp.abs(out - ref)))
    assert jnp.allclose(out, ref, atol=1e-2, rtol=1e-2), (
        f"mismatch vs reference (max abs err {max_err})")

    print("KERNEL_OK")
</pallas_src>

<mosaic_0001>
module attributes {stable_mosaic.version = 11 : i64} {
  func.func @_daam_kernel(%arg0: i32, %arg1: memref<4x16x128xf32, #tpu.memory_space<vmem>>, %arg2: memref<16x128xf32, #tpu.memory_space<vmem>>, %arg3: memref<16x128xf32, #tpu.memory_space<vmem>>, %arg4: memref<16x128xf32, #tpu.memory_space<vmem>>, %arg5: memref<4x16x128xf32, #tpu.memory_space<vmem>>) attributes {dimension_semantics = [#tpu.dimension_semantics<parallel>], iteration_bounds = array<i64: 2>, scalar_prefetch = 0 : i64, scratch_operands = 0 : i64, tpu.core_type = #tpu.core_type<tc>, window_params = [{transform_indices = @transform_0, window_bounds = array<i64: 4, 16, 128>}, {pipeline_mode = #tpu.pipeline_mode<synchronous>, transform_indices = @transform_1, window_bounds = array<i64: 16, 128>}, {pipeline_mode = #tpu.pipeline_mode<synchronous>, transform_indices = @transform_2, window_bounds = array<i64: 16, 128>}, {pipeline_mode = #tpu.pipeline_mode<synchronous>, transform_indices = @transform_3, window_bounds = array<i64: 16, 128>}, {transform_indices = @transform_4, window_bounds = array<i64: 4, 16, 128>}]} {
    %c0 = arith.constant 0 : index
    %c0_0 = arith.constant 0 : index
    %c0_1 = arith.constant 0 : index
    %0 = vector.load %arg1[%c0, %c0_0, %c0_1] : memref<4x16x128xf32, #tpu.memory_space<vmem>>, vector<4x16x128xf32>
    %c0_2 = arith.constant 0 : index
    %c0_3 = arith.constant 0 : index
    %1 = vector.load %arg2[%c0_2, %c0_3] : memref<16x128xf32, #tpu.memory_space<vmem>>, vector<16x128xf32>
    %cst = arith.constant 1.000000e+00 : f32
    %2 = vector.broadcast %cst : f32 to vector<16x128xf32>
    %3 = arith.cmpf oge, %1, %2 : vector<16x128xf32>
    %c1_i32 = arith.constant 1 : i32
    %4 = tpu.dynamic_rotate %0 by %c1_i32 dim 1 : vector<4x16x128xf32>, i32 -> vector<4x16x128xf32>
    %c15_i32 = arith.constant 15 : i32
    %5 = tpu.dynamic_rotate %0 by %c15_i32 dim 1 : vector<4x16x128xf32>, i32 -> vector<4x16x128xf32>
    %6 = vector.shape_cast %3 : vector<16x128xi1> to vector<1x16x128xi1>
    %7 = vector.broadcast %6 : vector<1x16x128xi1> to vector<4x16x128xi1>
    %8 = arith.select %7, %4, %5 : vector<4x16x128xi1>, vector<4x16x128xf32>
    %9 = arith.addf %0, %8 : vector<4x16x128xf32>
    %cst_4 = arith.constant 5.000000e-01 : f32
    %10 = vector.broadcast %cst_4 : f32 to vector<4x16x128xf32>
    %11 = arith.mulf %9, %10 : vector<4x16x128xf32>
    %12 = arith.subf %0, %11 : vector<4x16x128xf32>
    %13 = arith.mulf %12, %12 : vector<4x16x128xf32>
    %c1_i32_5 = arith.constant 1 : i32
    %14 = tpu.dynamic_rotate %13 by %c1_i32_5 dim 1 : vector<4x16x128xf32>, i32 -> vector<4x16x128xf32>
    %c15_i32_6 = arith.constant 15 : i32
    %15 = tpu.dynamic_rotate %13 by %c15_i32_6 dim 1 : vector<4x16x128xf32>, i32 -> vector<4x16x128xf32>
    %16 = vector.shape_cast %3 : vector<16x128xi1> to vector<1x16x128xi1>
    %17 = vector.broadcast %16 : vector<1x16x128xi1> to vector<4x16x128xi1>
    %18 = arith.select %17, %14, %15 : vector<4x16x128xi1>, vector<4x16x128xf32>
    %19 = arith.addf %13, %18 : vector<4x16x128xf32>
    %cst_7 = arith.constant 5.000000e-01 : f32
    %20 = vector.broadcast %cst_7 : f32 to vector<4x16x128xf32>
    %21 = arith.mulf %19, %20 : vector<4x16x128xf32>
    %cst_8 = arith.constant 1.001000e-05 : f32
    %22 = vector.broadcast %cst_8 : f32 to vector<4x16x128xf32>
    %23 = arith.addf %21, %22 : vector<4x16x128xf32>
    %24 = tpu.reciprocal %23 {approx = true} : vector<4x16x128xf32> -> vector<4x16x128xf32>
    %c0_9 = arith.constant 0 : index
    %c0_10 = arith.constant 0 : index
    %25 = vector.load %arg3[%c0_9, %c0_10] : memref<16x128xf32, #tpu.memory_space<vmem>>, vector<16x128xf32>
    %26 = vector.shape_cast %25 : vector<16x128xf32> to vector<1x16x128xf32>
    %27 = vector.broadcast %26 : vector<1x16x128xf32> to vector<4x16x128xf32>
    %28 = arith.subf %12, %27 : vector<4x16x128xf32>
    %29 = arith.mulf %28, %28 : vector<4x16x128xf32>
    %c0_11 = arith.constant 0 : index
    %c0_12 = arith.constant 0 : index
    %30 = vector.load %arg4[%c0_11, %c0_12] : memref<16x128xf32, #tpu.memory_space<vmem>>, vector<16x128xf32>
    %31 = vector.shape_cast %30 : vector<16x128xf32> to vector<1x16x128xf32>
    %32 = vector.broadcast %31 : vector<1x16x128xf32> to vector<4x16x128xf32>
    %33 = arith.mulf %24, %32 : vector<4x16x128xf32>
    %34 = arith.mulf %29, %33 : vector<4x16x128xf32>
    %35 = math.exp %34 : vector<4x16x128xf32>
    %36 = arith.mulf %0, %35 : vector<4x16x128xf32>
    %c0_13 = arith.constant 0 : index
    %c0_14 = arith.constant 0 : index
    %c0_15 = arith.constant 0 : index
    %37 = vector.load %arg5[%c0_13, %c0_14, %c0_15] : memref<4x16x128xf32, #tpu.memory_space<vmem>>, vector<4x16x128xf32>
    tpu.vector_store %arg5[%c0_13, %c0_14, %c0_15], %36 {strides = array<i32>} : memref<4x16x128xf32, #tpu.memory_space<vmem>>, vector<4x16x128xf32>,
    return
  }
  func.func @transform_0(%arg0: i32) -> (i32, i32, i32) {
    %c0_i32 = arith.constant 0 : i32
    %c0_i32_0 = arith.constant 0 : i32
    %c0_i32_1 = arith.constant 0 : i32
    return %arg0, %c0_i32, %c0_i32_0 : i32, i32, i32
  }
  func.func @transform_1(%arg0: i32) -> (i32, i32) {
    %c0_i32 = arith.constant 0 : i32
    %c0_i32_0 = arith.constant 0 : i32
    %c0_i32_1 = arith.constant 0 : i32
    return %c0_i32, %c0_i32_0 : i32, i32
  }
  func.func @transform_2(%arg0: i32) -> (i32, i32) {
    %c0_i32 = arith.constant 0 : i32
    %c0_i32_0 = arith.constant 0 : i32
    %c0_i32_1 = arith.constant 0 : i32
    return %c0_i32, %c0_i32_0 : i32, i32
  }
  func.func @transform_3(%arg0: i32) -> (i32, i32) {
    %c0_i32 = arith.constant 0 : i32
    %c0_i32_0 = arith.constant 0 : i32
    %c0_i32_1 = arith.constant 0 : i32
    return %c0_i32, %c0_i32_0 : i32, i32
  }
  func.func @transform_4(%arg0: i32) -> (i32, i32, i32) {
    %c0_i32 = arith.constant 0 : i32
    %c0_i32_0 = arith.constant 0 : i32
    %c0_i32_1 = arith.constant 0 : i32
    return %arg0, %c0_i32, %c0_i32_0 : i32, i32, i32
  }
}

</mosaic_0001>

<llo_original>
// kernel: tpu_custom_call.1
$region0: #{tpu_custom_call.1}
  #allocation0 [shape = 'u32[]', space=smem, size = 0x4, offset = 0x4, fixed_abs, tag = 'smem constant byte address 0x4 - core index']
  #allocation1 [shape = 'u32[144,128]{1,0:T(1,128)}', space=vmem, size = 0x12000, scoped, tag = 'internal scratch']
  %s0 = inlined_call_operand.hbm [shape: f32[8,16,128], index: 0, kind: input, shape index: {}]
  %s1 = inlined_call_operand.hbm [shape: f32[16,128], index: 1, kind: input, shape index: {}]
  %s2 = inlined_call_operand.hbm [shape: f32[16,128], index: 2, kind: input, shape index: {}]
  %s3 = inlined_call_operand.hbm [shape: f32[16,128], index: 3, kind: input, shape index: {}]
  %s4 = inlined_call_operand.hbm [shape: f32[8,16,128], index: 4, kind: output, shape index: {}]
  %s5 = sld [smem:[#allocation0]]
  $region65: #{tpu_custom_call.1} parent=0
    _
  %s7 = ssub.s32 1, %s5
  %s8 = scalar_select 0, %s7, %s5
  $region1: #{tpu_custom_call.1} parent=0
    #allocation2 [shape = 'u8[65536]{0}', space=vmem, size = 0x10000, scoped, tag = 'input window, operand 0']
    #allocation3 [shape = 's32[2]{0}', space=sflag, size = 0x8, scoped, tag = 'scoped memory for tpu_custom_call.1']
    #allocation4 [shape = 's32[2]{0}', space=sflag, size = 0x8, scoped, tag = 'scoped memory for tpu_custom_call.1']
    #allocation5 [shape = 'u8[8192]{0}', space=vmem, size = 0x2000, scoped, tag = 'input window, operand 1, single buffered']
    #allocation6 [shape = 's32[1]{0}', space=sflag, size = 0x4, scoped, tag = 'scoped memory for tpu_custom_call.1']
    #allocation7 [shape = 'u8[8192]{0}', space=vmem, size = 0x2000, scoped, tag = 'input window, operand 2, single buffered']
    #allocation8 [shape = 'u8[8192]{0}', space=vmem, size = 0x2000, scoped, tag = 'input window, operand 3, single buffered']
    #allocation9 [shape = 's32[1]{0}', space=sflag, size = 0x4, scoped, tag = 'scoped memory for tpu_custom_call.1']
    #allocation10 [shape = 'u8[65536]{0}', space=vmem, size = 0x10000, scoped, tag = 'output window, operand 0']
    %9 = vsyncpa [#allocation3], 0
    %s10 = scalar_lea.sflag [#allocation3], 1
    %11 = vsyncpa %s10, 0
    %12 = vsyncpa [#allocation6], 0
    %13 = vsyncpa [#allocation9], 0
    %14 = vsyncpa [#allocation4], 0
    %s15 = scalar_lea.sflag [#allocation4], 1
    %16 = vsyncpa %s15, 0
    loop: start=0, step=1, limit=4
    $region2: #{tpu_custom_call.1} parent=1 // loop_pre_header
      _
    $region3: #{tpu_custom_call.1} parent=1 // loop_header
      %s18 = sphi 0, %s22
      %p19 = scmp.ge.s32.totalorder %s18, 4
      %s28 = sphi 0, %s30
      %s31 = sphi 0, %s28
      %s32 = sphi 0, %s31
      %s48 = sphi 0, %s32
      %s52 = sphi 0, %s52
      %s54 = sphi 0, %s52
      %s55 = sphi 0, %s54
      %s69 = sphi 0, %s55
      %s73 = sphi 0, %s73
      %s75 = sphi 0, %s73
      %s76 = sphi 0, %s75
      %s90 = sphi 0, %s76
      %s94 = sphi 0, %s94
      %s96 = sphi 0, %s94
      %s97 = sphi 0, %s96
      %s111 = sphi 0, %s97
      %s117 = sphi 0, %s119
      %s120 = sphi 0, %s117
      %s121 = sphi 0, %s120
      %s137 = sphi 0, %s121
    $region4: #{tpu_custom_call.1} parent=1 // loop_header_branch
      %21 = sbr.rel (%p19) target = $region8
    $region5: #{tpu_custom_call.1} parent=1 // loop_body
      %s23 = ssub.s32 %s18, 1
      %s24 = ssub.s32 %s18, 2
      %s25 = sadd.s32 %s18, 1
      %s26 = ssub.s32 %s18, %s25
      %p27 = scmp.eq.s32.totalorder %s26, 0
      %s29 = sadd.s32 %s28, 1
      %s30 = scalar_select %p27, %s28, %s29
      %p33 = pneg %p27
      %p34 = scmp.eq.s32.totalorder %s18, 1
      %p35 = por %p33, %p34
      %p36 = scmp.ne.s32.totalorder %s28, %s31
      %p37 = scmp.eq.s32.totalorder %s18, 0
      %p38 = por %p36, %p37
      %p39 = scmp.ne.s32.totalorder %s28, %s31
      %p40 = scmp.eq.s32.totalorder %s23, 1
      %p41 = por %p39, %p40
      %p42 = scmp.ne.s32.totalorder %s31, %s32
      %p43 = scmp.eq.s32.totalorder %s23, 0
      %p44 = por %p42, %p43
      %p45 = scmp.ne.s32.totalorder %s31, %s32
      %p46 = scmp.eq.s32.totalorder %s24, 1
      %p47 = por %p45, %p46
      %p49 = scmp.ne.s32.totalorder %s32, %s48
      %p50 = scmp.eq.s32.totalorder %s24, 0
      %p51 = por %p49, %p50
      %s53 = sadd.s32 %s52, 1
      %p56 = scmp.eq.s32.totalorder %s18, 1
      %p57 = scmp.ne.s32.totalorder %s52, %s54
      %p58 = scmp.eq.s32.totalorder %s18, 0
      %p59 = por %p57, %p58
      %p60 = scmp.ne.s32.totalorder %s52, %s54
      %p61 = scmp.eq.s32.totalorder %s23, 1
      %p62 = por %p60, %p61
      %p63 = scmp.ne.s32.totalorder %s54, %s55
      %p64 = scmp.eq.s32.totalorder %s23, 0
      %p65 = por %p63, %p64
      %p66 = scmp.ne.s32.totalorder %s54, %s55
      %p67 = scmp.eq.s32.totalorder %s24, 1
      %p68 = por %p66, %p67
      %p70 = scmp.ne.s32.totalorder %s55, %s69
      %p71 = scmp.eq.s32.totalorder %s24, 0
      %p72 = por %p70, %p71
      %s74 = sadd.s32 %s73, 1
      %p77 = scmp.eq.s32.totalorder %s18, 1
      %p78 = scmp.ne.s32.totalorder %s73, %s75
      %p79 = scmp.eq.s32.totalorder %s18, 0
      %p80 = por %p78, %p79
      %p81 = scmp.ne.s32.totalorder %s73, %s75
      %p82 = scmp.eq.s32.totalorder %s23, 1
      %p83 = por %p81, %p82
      %p84 = scmp.ne.s32.totalorder %s75, %s76
      %p85 = scmp.eq.s32.totalorder %s23, 0
      %p86 = por %p84, %p85
      %p87 = scmp.ne.s32.totalorder %s75, %s76
      %p88 = scmp.eq.s32.totalorder %s24, 1
      %p89 = por %p87, %p88
      %p91 = scmp.ne.s32.totalorder %s76, %s90
      %p92 = scmp.eq.s32.totalorder %s24, 0
      %p93 = por %p91, %p92
      %s95 = sadd.s32 %s94, 1
      %p98 = scmp.eq.s32.totalorder %s18, 1
      %p99 = scmp.ne.s32.totalorder %s94, %s96
      %p100 = scmp.eq.s32.totalorder %s18, 0
      %p101 = por %p99, %p100
      %p102 = scmp.ne.s32.totalorder %s94, %s96
      %p103 = scmp.eq.s32.totalorder %s23, 1
      %p104 = por %p102, %p103
      %p105 = scmp.ne.s32.totalorder %s96, %s97
      %p106 = scmp.eq.s32.totalorder %s23, 0
      %p107 = por %p105, %p106
      %p108 = scmp.ne.s32.totalorder %s96, %s97
      %p109 = scmp.eq.s32.totalorder %s24, 1
      %p110 = por %p108, %p109
      %p112 = scmp.ne.s32.totalorder %s97, %s111
      %p113 = scmp.eq.s32.totalorder %s24, 0
      %p114 = por %p112, %p113
      %s115 = ssub.s32 %s18, %s25
      %p116 = scmp.eq.s32.totalorder %s115, 0
      %s118 = sadd.s32 %s117, 1
      %s119 = scalar_select %p116, %s117, %s118
      %p122 = pneg %p116
      %p123 = scmp.eq.s32.totalorder %s18, 1
      %p124 = por %p122, %p123
      %p125 = scmp.ne.s32.totalorder %s117, %s120
      %p126 = scmp.eq.s32.totalorder %s18, 0
      %p127 = por %p125, %p126
      %p128 = scmp.ne.s32.totalorder %s117, %s120
      %p129 = scmp.eq.s32.totalorder %s23, 1
      %p130 = por %p128, %p129
      %p131 = scmp.ne.s32.totalorder %s120, %s121
      %p132 = scmp.eq.s32.totalorder %s23, 0
      %p133 = por %p131, %p132
      %p134 = scmp.ne.s32.totalorder %s120, %s121
      %p135 = scmp.eq.s32.totalorder %s24, 1
      %p136 = por %p134, %p135
      %p138 = scmp.ne.s32.totalorder %s121, %s137
      %p139 = scmp.eq.s32.totalorder %s24, 0
      %p140 = por %p138, %p139
      %p141 = scmp.le.s32.totalorder 1, %s18
      %p142 = scmp.lt.s32.totalorder %s18, 3
      %p143 = pnand %p141, %p142
      %p144 = pneg %p143
      // Predicated region
      $region9: #{tpu_custom_call.1} parent=5 // pred_check
        _
      $region10: #{tpu_custom_call.1} parent=5 // pred_check_branch
        %146 = sbr.rel (%p143) target = $region12
      $region11: #{tpu_custom_call.1} parent=5 // pred_region
        %s147 = ssub.s32 %s18, 1
        // Predicated region
        $region13: #{tpu_custom_call.1} parent=11 // pred_check
          %p148 = pneg %p65
        $region14: #{tpu_custom_call.1} parent=11 // pred_check_branch
          %150 = sbr.rel (%p148) target = $region16
        $region15: #{tpu_custom_call.1} parent=11 // pred_region
          %s152 = ssub.s32 256, 256
          %153 = vsyncadd [#allocation6], %s152
          %s154 = sshll.u32 [#allocation5], 4
          %s155 = int_to_ptr.vmem [resolvable:$true] %s154
          %160 = dma.hbm_to_vmem [thread:$0]  %s1, 256, %s155, [#allocation6], 128, 128, 8
        $region16: #{tpu_custom_call.1} parent=11 // pred_fallthru
          _
        // Predicated region
        $region17: #{tpu_custom_call.1} parent=11 // pred_check
          %p161 = pneg %p86
        $region18: #{tpu_custom_call.1} parent=11 // pred_check_branch
          %163 = sbr.rel (%p161) target = $region20
        $region19: #{tpu_custom_call.1} parent=11 // pred_region
          %s165 = ssub.s32 256, 256
          %166 = vsyncadd [#allocation6], %s165
          %s167 = sshll.u32 [#allocation7], 4
          %s168 = int_to_ptr.vmem [resolvable:$true] %s167
          %173 = dma.hbm_to_vmem [thread:$0]  %s2, 256, %s168, [#allocation6], 128, 128, 8
        $region20: #{tpu_custom_call.1} parent=11 // pred_fallthru
          _
        // Predicated region
        $region21: #{tpu_custom_call.1} parent=11 // pred_check
          %p174 = pneg %p107
        $region22: #{tpu_custom_call.1} parent=11 // pred_check_branch
          %176 = sbr.rel (%p174) target = $region24
        $region23: #{tpu_custom_call.1} parent=11 // pred_region
          %s178 = ssub.s32 256, 256
          %179 = vsyncadd [#allocation9], %s178
          %s180 = sshll.u32 [#allocation8], 4
          %s181 = int_to_ptr.vmem [resolvable:$true] %s180
          %186 = dma.hbm_to_vmem [thread:$0]  %s3, 256, %s181, [#allocation9], 128, 128, 8
        $region24: #{tpu_custom_call.1} parent=11 // pred_fallthru
          _
      $region12: #{tpu_custom_call.1} parent=5 // pred_fallthru
        _
      %p187 = scmp.lt.s32.totalorder %s18, 2
      // Predicated region
      $region25: #{tpu_custom_call.1} parent=5 // pred_check
        %p188 = pneg %p187
      $region26: #{tpu_custom_call.1} parent=5 // pred_check_branch
        %190 = sbr.rel (%p188) target = $region28
      $region27: #{tpu_custom_call.1} parent=5 // pred_region
        // Predicated region
        $region29: #{tpu_custom_call.1} parent=27 // pred_check
          %p191 = pneg %p38
        $region30: #{tpu_custom_call.1} parent=27 // pred_check_branch
          %193 = sbr.rel (%p191) target = $region32
        $region31: #{tpu_custom_call.1} parent=27 // pred_region
          %s194 = sand.u32 %s28, 1
          %s195 = scalar_lea.sflag [#allocation3], %s194
          %s196 = sand.u32 %s28, 1
          %s197 = smul.addr %s196, 64
          %s198 = scalar_lea.vmem [#allocation2], %s197
          %s199 = smul.u32 4, %s18
          %s201 = ssub.s32 1024, 1024
          %202 = vsyncadd %s195, %s201
          %s203 = smul.addr %s199, 2
          %s204 = smul.addr %s203, 128
          %s205 = scalar_lea.hbm %s0, %s204
          %s206 = sshll.u32 %s198, 4
          %s207 = int_to_ptr.vmem [resolvable:$true] %s206
          %212 = dma.hbm_to_vmem [thread:$0]  %s205, 1024, %s207, %s195, 128, 128, 8
        $region32: #{tpu_custom_call.1} parent=27 // pred_fallthru
          _
      $region28: #{tpu_custom_call.1} parent=5 // pred_fallthru
        _
      %p213 = scmp.le.s32.totalorder 1, %s18
      %p214 = scmp.lt.s32.totalorder %s18, 3
      %p215 = pnand %p213, %p214
      %p216 = pneg %p215
      // Predicated region
      $region33: #{tpu_custom_call.1} parent=5 // pred_check
        _
      $region34: #{tpu_custom_call.1} parent=5 // pred_check_branch
        %218 = sbr.rel (%p215) target = $region36
      $region35: #{tpu_custom_call.1} parent=5 // pred_region
        %s219 = ssub.s32 %s18, 1
        %s220 = sand.u32 %s31, 1
        %s221 = scalar_lea.sflag [#allocation3], %s220
        %s222 = sand.u32 %s31, 1
        %s223 = smul.addr %s222, 64
        %s224 = scalar_lea.vmem [#allocation2], %s223
        // Predicated region
        $region37: #{tpu_custom_call.1} parent=35 // pred_check
          %p225 = pneg %p44
        $region38: #{tpu_custom_call.1} parent=35 // pred_check_branch
          %227 = sbr.rel (%p225) target = $region40
        $region39: #{tpu_custom_call.1} parent=35 // pred_region
          %228 = dma.done %s221, 1024
        $region40: #{tpu_custom_call.1} parent=35 // pred_fallthru
          _
        // Predicated region
        $region41: #{tpu_custom_call.1} parent=35 // pred_check
          %p229 = pneg %p65
        $region42: #{tpu_custom_call.1} parent=35 // pred_check_branch
          %231 = sbr.rel (%p229) target = $region44
        $region43: #{tpu_custom_call.1} parent=35 // pred_region
          %232 = dma.done [#allocation6], 256
        $region44: #{tpu_custom_call.1} parent=35 // pred_fallthru
          _
        // Predicated region
        $region45: #{tpu_custom_call.1} parent=35 // pred_check
          %p233 = pneg %p86
        $region46: #{tpu_custom_call.1} parent=35 // pred_check_branch
          %235 = sbr.rel (%p233) target = $region48
        $region47: #{tpu_custom_call.1} parent=35 // pred_region
          %236 = dma.done [#allocation6], 256
        $region48: #{tpu_custom_call.1} parent=35 // pred_fallthru
          _
        // Predicated region
        $region49: #{tpu_custom_call.1} parent=35 // pred_check
          %p237 = pneg %p107
        $region50: #{tpu_custom_call.1} parent=35 // pred_check_branch
          %239 = sbr.rel (%p237) target = $region52
        $region51: #{tpu_custom_call.1} parent=35 // pred_region
          %240 = dma.done [#allocation9], 256
        $region52: #{tpu_custom_call.1} parent=35 // pred_fallthru
          _
        %s241 = sand.u32 %s31, 1
        %s242 = scalar_lea.sflag [#allocation3], %s241
        %s243 = sand.u32 %s31, 1
        %s244 = smul.addr %s243, 64
        %s245 = scalar_lea.vmem [#allocation2], %s244
        %p246 = pneg %p44
        %p247 = pneg %p41
        %p248 = pneg %p65
        %p249 = pneg %p62
        %p250 = pneg %p86
        %p251 = pneg %p83
        %p252 = pneg %p107
        %p253 = pneg %p104
        %p254 = pneg %p133
        %p255 = pneg %p130
        %s256 = sand.u32 %s120, 1
        %s257 = scalar_lea.sflag [#allocation4], %s256
        %s258 = sand.u32 %s120, 1
        %s259 = smul.addr %s258, 64
        %s260 = scalar_lea.vmem [#allocation10], %s259
        %s261 = smul.u32 4, %s23
        %s262 = smul.u32 4, %s23
        %v263 = vld [vmem:[%s224] sm:$0xff]
        %v264 = vld [vmem:[%s224 + $0x8] sm:$0xff]
        %v265 = vld [vmem:[%s224 + $0x10] sm:$0xff]
        %v266 = vld [vmem:[%s224 + $0x18] sm:$0xff]
        %v267 = vld [vmem:[%s224 + $0x20] sm:$0xff]
        %v268 = vld [vmem:[%s224 + $0x28] sm:$0xff]
        %v269 = vld [vmem:[%s224 + $0x30] sm:$0xff]
        %v270 = vld [vmem:[%s224 + $0x38] sm:$0xff]
        %v271 = vld [vmem:[#allocation5] sm:$0xff]
        %v272 = vld [vmem:[#allocation5 + $0x8] sm:$0xff]
        %vm273 = vcmp.ge.f32.partialorder %v271, 1.0
        %vm274 = vcmp.ge.f32.partialorder %v272, 1.0
        %v275 = vrot.slane %v263, 7
        %v276 = vrot.slane %v265, 7
        %v277 = vrot.slane %v267, 7
        %v278 = vrot.slane %v269, 7
        %v279 = vrot.slane %v264, 7
        %v280 = vrot.slane %v266, 7
        %v281 = vrot.slane %v268, 7
        %v282 = vrot.slane %v270, 7
        %v283 = vlaneseq
        %v284 = vshrl.u32 %v283, 7
        %vm285 = vcmp.lt.s32.totalorder %v284, 1
        %v286 = vsel %vm285, %v275, %v279
        %v287 = vsel %vm285, %v276, %v280
        %v288 = vsel %vm285, %v277, %v281
        %v289 = vsel %vm285, %v278, %v282
        %v290 = vsel %vm285, %v279, %v275
        %v291 = vsel %vm285, %v280, %v276
        %v292 = vsel %vm285, %v281, %v277
        %v293 = vsel %vm285, %v282, %v278
        %v294 = vrot.slane %v263, 1
        %v295 = vrot.slane %v265, 1
        %v296 = vrot.slane %v267, 1
        %v297 = vrot.slane %v269, 1
        %v298 = vrot.slane %v264, 1
        %v299 = vrot.slane %v266, 1
        %v300 = vrot.slane %v268, 1
        %v301 = vrot.slane %v270, 1
        %vm302 = vcmp.lt.s32.totalorder %v284, 7
        %v303 = vsel %vm302, %v294, %v298
        %v304 = vsel %vm302, %v295, %v299
        %v305 = vsel %vm302, %v296, %v300
        %v306 = vsel %vm302, %v297, %v301
        %v307 = vsel %vm302, %v298, %v294
        %v308 = vsel %vm302, %v299, %v295
        %v309 = vsel %vm302, %v300, %v296
        %v310 = vsel %vm302, %v301, %v297
        %v311 = vsel %vm273, 1, 0
        %v312 = vsel %vm274, 1, 0
        %vm313 = vcmp.eq.s32.totalorder %v311, 1
        %vm314 = vcmp.eq.s32.totalorder %v312, 1
        %v315 = vsel %vm313, %v290, %v303
        %v316 = vsel %vm314, %v286, %v307
        %v317 = vsel %vm313, %v291, %v304
        %v318 = vsel %vm314, %v287, %v308
        %v319 = vsel %vm313, %v292, %v305
        %v320 = vsel %vm314, %v288, %v309
        %v321 = vsel %vm313, %v293, %v306
        %v322 = vsel %vm314, %v289, %v310
        %v323 = vadd.f32 %v263, %v315
        %v324 = vadd.f32 %v264, %v316
        %v325 = vadd.f32 %v265, %v317
        %v326 = vadd.f32 %v266, %v318
        %v327 = vadd.f32 %v267, %v319
        %v328 = vadd.f32 %v268, %v320
        %v329 = vadd.f32 %v269, %v321
        %v330 = vadd.f32 %v270, %v322
        %v331 = vmul.f32 %v323, 0.5
        %v332 = vmul.f32 %v324, 0.5
        %v333 = vmul.f32 %v325, 0.5
        %v334 = vmul.f32 %v326, 0.5
        %v335 = vmul.f32 %v327, 0.5
        %v336 = vmul.f32 %v328, 0.5
        %v337 = vmul.f32 %v329, 0.5
        %v338 = vmul.f32 %v330, 0.5
        %v339 = vsub.f32 %v263, %v331
        %v340 = vsub.f32 %v264, %v332
        %v341 = vsub.f32 %v265, %v333
        %v342 = vsub.f32 %v266, %v334
        %v343 = vsub.f32 %v267, %v335
        %v344 = vsub.f32 %v268, %v336
        %v345 = vsub.f32 %v269, %v337
        %v346 = vsub.f32 %v270, %v338
        %v347 = vmul.f32 %v339, %v339
        %v348 = vmul.f32 %v340, %v340
        %v349 = vmul.f32 %v341, %v341
        %v350 = vmul.f32 %v342, %v342
        %v351 = vmul.f32 %v343, %v343
        %v352 = vmul.f32 %v344, %v344
        %v353 = vmul.f32 %v345, %v345
        %v354 = vmul.f32 %v346, %v346
        %v355 = vrot.slane %v347, 7
        %v356 = vrot.slane %v349, 7
        %v357 = vrot.slane %v351, 7
        %v358 = vrot.slane %v353, 7
        %v359 = vrot.slane %v348, 7
        %v360 = vrot.slane %v350, 7
        %v361 = vrot.slane %v352, 7
        %v362 = vrot.slane %v354, 7
        %v363 = vsel %vm285, %v355, %v359
        %v364 = vsel %vm285, %v356, %v360
        %v365 = vsel %vm285, %v357, %v361
        %v366 = vsel %vm285, %v358, %v362
        %v367 = vsel %vm285, %v359, %v355
        %v368 = vsel %vm285, %v360, %v356
        %v369 = vsel %vm285, %v361, %v357
        %v370 = vsel %vm285, %v362, %v358
        %v371 = vrot.slane %v347, 1
        %v372 = vrot.slane %v349, 1
        %v373 = vrot.slane %v351, 1
        %v374 = vrot.slane %v353, 1
        %v375 = vrot.slane %v348, 1
        %v376 = vrot.slane %v350, 1
        %v377 = vrot.slane %v352, 1
        %v378 = vrot.slane %v354, 1
        %v379 = vsel %vm302, %v371, %v375
        %v380 = vsel %vm302, %v372, %v376
        %v381 = vsel %vm302, %v373, %v377
        %v382 = vsel %vm302, %v374, %v378
        %v383 = vsel %vm302, %v375, %v371
        %v384 = vsel %vm302, %v376, %v372
        %v385 = vsel %vm302, %v377, %v373
        %v386 = vsel %vm302, %v378, %v374
        %v387 = vsel %vm313, %v367, %v379
        %v388 = vsel %vm314, %v363, %v383
        %v389 = vsel %vm313, %v368, %v380
        %v390 = vsel %vm314, %v364, %v384
        %v391 = vsel %vm313, %v369, %v381
        %v392 = vsel %vm314, %v365, %v385
        %v393 = vsel %vm313, %v370, %v382
        %v394 = vsel %vm314, %v366, %v386
        %v395 = vadd.f32 %v347, %v387
        %v396 = vadd.f32 %v348, %v388
        %v397 = vadd.f32 %v349, %v389
        %v398 = vadd.f32 %v350, %v390
        %v399 = vadd.f32 %v351, %v391
        %v400 = vadd.f32 %v352, %v392
        %v401 = vadd.f32 %v353, %v393
        %v402 = vadd.f32 %v354, %v394
        %v403 = vmul.f32 %v395, 0.5
        %v404 = vmul.f32 %v396, 0.5
        %v405 = vmul.f32 %v397, 0.5
        %v406 = vmul.f32 %v398, 0.5
        %v407 = vmul.f32 %v399, 0.5
        %v408 = vmul.f32 %v400, 0.5
        %v409 = vmul.f32 %v401, 0.5
        %v410 = vmul.f32 %v402, 0.5
        %v411 = vadd.f32 %v403, 1.001e-05
        %v412 = vadd.f32 %v404, 1.001e-05
        %v413 = vadd.f32 %v405, 1.001e-05
        %v414 = vadd.f32 %v406, 1.001e-05
        %v415 = vadd.f32 %v407, 1.001e-05
        %v416 = vadd.f32 %v408, 1.001e-05
        %v417 = vadd.f32 %v409, 1.001e-05
        %v418 = vadd.f32 %v410, 1.001e-05
        %v419 = vrcp.pop %v411
        %v420 = vrcp.pop %v412
        %v421 = vrcp.pop %v413
        %v422 = vrcp.pop %v414
        %v423 = vrcp.pop %v415
        %v424 = vrcp.pop %v416
        %v425 = vrcp.pop %v417
        %v426 = vrcp.pop %v418
        %v427 = vld [vmem:[#allocation7] sm:$0xff]
        %v428 = vld [vmem:[#allocation7 + $0x8] sm:$0xff]
        %v429 = vsub.f32 %v339, %v427
        %v430 = vsub.f32 %v340, %v428
        %v431 = vsub.f32 %v341, %v427
        %v432 = vsub.f32 %v342, %v428
        %v433 = vsub.f32 %v343, %v427
        %v434 = vsub.f32 %v344, %v428
        %v435 = vsub.f32 %v345, %v427
        %v436 = vsub.f32 %v346, %v428
        %v437 = vmul.f32 %v429, %v429
        %v438 = vmul.f32 %v430, %v430
        %v439 = vmul.f32 %v431, %v431
        %v440 = vmul.f32 %v432, %v432
        %v441 = vmul.f32 %v433, %v433
        %v442 = vmul.f32 %v434, %v434
        %v443 = vmul.f32 %v435, %v435
        %v444 = vmul.f32 %v436, %v436
        %v445 = vld [vmem:[#allocation8] sm:$0xff]
        %v446 = vld [vmem:[#allocation8 + $0x8] sm:$0xff]
        %v447 = vmul.f32 %v419, %v445
        %v448 = vmul.f32 %v420, %v446
        %v449 = vmul.f32 %v421, %v445
        %v450 = vmul.f32 %v422, %v446
        %v451 = vmul.f32 %v423, %v445
        %v452 = vmul.f32 %v424, %v446
        %v453 = vmul.f32 %v425, %v445
        %v454 = vmul.f32 %v426, %v446
        %v455 = vmul.f32 %v437, %v447
        %v456 = vmul.f32 %v438, %v448
        %v457 = vmul.f32 %v439, %v449
        %v458 = vmul.f32 %v440, %v450
        %v459 = vmul.f32 %v441, %v451
        %v460 = vmul.f32 %v442, %v452
        %v461 = vmul.f32 %v443, %v453
        %v462 = vmul.f32 %v444, %v454
        %v463 = vmul.f32 %v455, 1.442695
        %v464 = vpow.pop %v463
        %v465 = vmul.f32 %v456, 1.442695
        %v466 = vpow.pop %v465
        %v467 = vmul.f32 %v457, 1.442695
        %v468 = vpow.pop %v467
        %v469 = vmul.f32 %v458, 1.442695
        %v470 = vpow.pop %v469
        %v471 = vmul.f32 %v459, 1.442695
        %v472 = vpow.pop %v471
        %v473 = vmul.f32 %v460, 1.442695
        %v474 = vpow.pop %v473
        %v475 = vmul.f32 %v461, 1.442695
        %v476 = vpow.pop %v475
        %v477 = vmul.f32 %v462, 1.442695
        %v478 = vpow.pop %v477
        %v479 = vmul.f32 %v263, %v464
        %v480 = vmul.f32 %v264, %v466
        %v481 = vmul.f32 %v265, %v468
        %v482 = vmul.f32 %v266, %v470
        %v483 = vmul.f32 %v267, %v472
        %v484 = vmul.f32 %v268, %v474
        %v485 = vmul.f32 %v269, %v476
        %v486 = vmul.f32 %v270, %v478
        %487 = vst [vmem:[%s260] sm:$0xff] %v479
        %488 = vst [vmem:[%s260 + $0x8] sm:$0xff] %v480
        %489 = vst [vmem:[%s260 + $0x10] sm:$0xff] %v481
        %490 = vst [vmem:[%s260 + $0x18] sm:$0xff] %v482
        %491 = vst [vmem:[%s260 + $0x20] sm:$0xff] %v483
        %492 = vst [vmem:[%s260 + $0x28] sm:$0xff] %v484
        %493 = vst [vmem:[%s260 + $0x30] sm:$0xff] %v485
        %494 = vst [vmem:[%s260 + $0x38] sm:$0xff] %v486
        %s495 = sand.u32 %s120, 1
        %s496 = scalar_lea.sflag [#allocation4], %s495
        %s497 = sand.u32 %s120, 1
        %s498 = smul.addr %s497, 64
        %s499 = scalar_lea.vmem [#allocation10], %s498
        // Predicated region
        $region53: #{tpu_custom_call.1} parent=35 // pred_check
          %p500 = pneg %p130
        $region54: #{tpu_custom_call.1} parent=35 // pred_check_branch
          %502 = sbr.rel (%p500) target = $region56
        $region55: #{tpu_custom_call.1} parent=35 // pred_region
          %s503 = smul.u32 4, %s23
          %s505 = ssub.s32 1024, 1024
          %506 = vsyncadd %s496, %s505
          %s507 = smul.addr %s503, 2
          %s508 = smul.addr %s507, 128
          %s509 = scalar_lea.hbm %s4, %s508
          %s510 = sshll.u32 %s499, 4
          %s511 = int_to_ptr.vmem [resolvable:$true] %s510
          %516 = dma.vmem_to_hbm [thread:$0]  %s511, 1024, %s509, %s496, 128, 128, 8
        $region56: #{tpu_custom_call.1} parent=35 // pred_fallthru
          _
      $region36: #{tpu_custom_call.1} parent=5 // pred_fallthru
        _
      %p517 = scmp.le.s32.totalorder 2, %s18
      // Predicated region
      $region57: #{tpu_custom_call.1} parent=5 // pred_check
        %p518 = pneg %p517
      $region58: #{tpu_custom_call.1} parent=5 // pred_check_branch
        %520 = sbr.rel (%p518) target = $region60
      $region59: #{tpu_custom_call.1} parent=5 // pred_region
        %s521 = ssub.s32 %s18, 2
        // Predicated region
        $region61: #{tpu_custom_call.1} parent=59 // pred_check
          %p522 = pneg %p136
        $region62: #{tpu_custom_call.1} parent=59 // pred_check_branch
          %524 = sbr.rel (%p522) target = $region64
        $region63: #{tpu_custom_call.1} parent=59 // pred_region
          %s525 = sand.u32 %s121, 1
          %s526 = scalar_lea.sflag [#allocation4], %s525
          %s527 = sand.u32 %s121, 1
          %s528 = smul.addr %s527, 64
          %s529 = scalar_lea.vmem [#allocation10], %s528
          %530 = dma.done %s526, 1024
        $region64: #{tpu_custom_call.1} parent=59 // pred_fallthru
          _
      $region60: #{tpu_custom_call.1} parent=5 // pred_fallthru
        _
    $region6: #{tpu_custom_call.1} parent=1 // loop_footer
      %s22 = sadd.s32 1, %s18
    $region7: #{tpu_custom_call.1} parent=1 // loop_footer_branch
      %17 = sbr.rel target = $region3
    $region8: #{tpu_custom_call.1} parent=1 // loop_exit
      _
    %531 = vsyncpa [#allocation3], 1
    %s532 = scalar_lea.sflag [#allocation3], 1
    %533 = vsyncpa %s532, 1
    %534 = vsyncpa [#allocation6], 1
    %535 = vsyncpa [#allocation9], 1
    %536 = vsyncpa [#allocation4], 1
    %s537 = scalar_lea.sflag [#allocation4], 1
    %538 = vsyncpa %s537, 1

</llo_original>
